<compile_context>
chip_gen: v7x
topology: tpu7x:2x2x1
jax: 0.10.0
libtpu: 0.0.40
codegen_flags: <defaults>
</compile_context>

<pallas_src>
import jax
import jax.numpy as jnp
import numpy as np
from jax.experimental import pallas as pl
from jax.experimental.pallas import tpu as pltpu


def _make_crop_kernel(num_clips: int, frames_per_clip: int, stride: int,
                      frame_stride: int, depth: int):
    contiguous = (frame_stride == 1)

    def kernel(in_ref, out_ref, sem):
        # in_ref : (C, T, H*W)                       raw HBM ref (no auto-DMA)
        # out_ref: (num_clips, C, frames, H*W)       raw HBM ref (no auto-DMA)
        c = pl.program_id(0)
        slot = c % depth  # depth is a power of two

        def start_clip(clip_idx, slot_idx):
            base = clip_idx * stride
            if contiguous:
                # One big strided HBM->HBM copy for the whole clip.
                pltpu.make_async_copy(
                    in_ref.at[:, pl.ds(base, frames_per_clip), :],
                    out_ref.at[clip_idx],
                    sem.at[slot_idx]).start()
            else:
                # One DMA per frame (each C*H*W bytes — large enough to be
                # bandwidth-efficient); all signal the same semaphore slot.
                for f in range(frames_per_clip):
                    pltpu.make_async_copy(
                        in_ref.at[:, pl.ds(base + f * frame_stride, 1), :],
                        out_ref.at[clip_idx, :, pl.ds(f, 1), :],
                        sem.at[slot_idx]).start()

        def wait_clip(slot_idx):
            # Descriptor indices only determine the byte count to wait for,
            # so canonical in-bounds indices are used.
            if contiguous:
                pltpu.make_async_copy(
                    in_ref.at[:, pl.ds(0, frames_per_clip), :],
                    out_ref.at[0],
                    sem.at[slot_idx]).wait()
            else:
                for _ in range(frames_per_clip):
                    pltpu.make_async_copy(
                        in_ref.at[:, pl.ds(0, 1), :],
                        out_ref.at[0, :, pl.ds(0, 1), :],
                        sem.at[slot_idx]).wait()

        # Free this ring slot: wait for the clip issued `depth` steps ago.
        @pl.when(c >= depth)
        def _():
            wait_clip(slot)

        start_clip(c, slot)

        # Final grid step: drain everything still in flight.
        @pl.when(c == num_clips - 1)
        def _():
            for j in range(min(depth, num_clips)):
                wait_clip((c - j) % depth)

    return kernel


def temporal_crop(video: jax.Array,
                  frames_per_clip: int = 8,
                  stride: int = 8,
                  frame_stride: int = 1) -> jax.Array:
    """Pallas implementation of TemporalCrop.forward.

    Args:
      video: (C, T, H, W) array.
    Returns:
      Stacked clips of shape (num_clips, C, frames_per_clip, H, W).
      (The PyTorch module returns a Python list; `list(out)` recovers it.)
    """
    assert video.ndim == 4, "Must be (C, T, H, W)"
    C, T, H, W = video.shape
    span = frames_per_clip * frame_stride
    num_clips = len(range(0, T - span + 1, stride))
    assert num_clips > 0, "video too short for requested crop config"

    HW = H * W
    video2 = video.reshape(C, T, HW)  # contiguous reshape: free

    # Ring depth (power of two, <= 4) for in-flight clip copies.
    depth = 4 if num_clips >= 4 else (2 if num_clips >= 2 else 1)

    itemsize = video.dtype.itemsize
    clip_bytes = C * frames_per_clip * HW * itemsize
    out_bytes = num_clips * clip_bytes

    stacked = pl.pallas_call(
        _make_crop_kernel(num_clips, frames_per_clip, stride, frame_stride,
                          depth),
        out_shape=jax.ShapeDtypeStruct(
            (num_clips, C, frames_per_clip, HW), video.dtype),
        grid=(num_clips,),
        in_specs=[pl.BlockSpec(memory_space=pl.ANY)],
        out_specs=pl.BlockSpec(memory_space=pl.ANY),
        scratch_shapes=[pltpu.SemaphoreType.DMA((depth,))],
        compiler_params=pltpu.CompilerParams(
            dimension_semantics=("arbitrary",)),
        cost_estimate=pl.CostEstimate(
            flops=0, transcendentals=0, bytes_accessed=2 * out_bytes),
    )(video2)

    return stacked.reshape(num_clips, C, frames_per_clip, H, W)


def _numpy_reference(video_np, frames_per_clip, stride, frame_stride):
    span = frames_per_clip * frame_stride
    clips = []
    for start in range(0, video_np.shape[1] - span + 1, stride):
        end = start + span
        clips.append(video_np[:, start:end:frame_stride, ...])
    return np.stack(clips, axis=0)


if __name__ == "__main__":
    key = jax.random.PRNGKey(0)
    C, T, H, W = 4, 16, 16, 16
    video = jax.random.normal(key, (C, T, H, W), dtype=jnp.float32)
    v_np = np.asarray(video)

    # Exercise: contiguous non-overlapping clips (module defaults), strided
    # temporal gather (frame_stride == 2), and overlapping clips with enough
    # grid steps to hit the semaphore-ring "wait previous" path.
    for frames_per_clip, stride, frame_stride in [(8, 8, 1), (4, 4, 2),
                                                  (4, 2, 1)]:
        out = temporal_crop(video, frames_per_clip, stride, frame_stride)
        out = jax.block_until_ready(out)
        ref = _numpy_reference(v_np, frames_per_clip, stride, frame_stride)
        assert out.shape == ref.shape, (out.shape, ref.shape)
        np.testing.assert_allclose(np.asarray(out), ref, rtol=0, atol=0)

    print("KERNEL_OK")
</pallas_src>

<mosaic_0001>
module attributes {stable_mosaic.version = 11 : i64} {
  func.func @kernel(%arg0: i32, %arg1: memref<4x16x256xf32, #tpu.memory_space<any>>, %arg2: memref<2x4x8x256xf32, #tpu.memory_space<any>>, %arg3: memref<2x!tpu.dma_semaphore, #tpu.memory_space<semaphore_mem>>) attributes {dimension_semantics = [#tpu.dimension_semantics<arbitrary>], iteration_bounds = array<i64: 2>, scalar_prefetch = 0 : i64, scratch_operands = 1 : i64, tpu.core_type = #tpu.core_type<tc>, window_params = [{}, {}]} {
    %c2_i32 = arith.constant 2 : i32
    %c0_i32 = arith.constant 0 : i32
    %0 = arith.cmpi eq, %c2_i32, %c0_i32 : i32
    %c1_i32 = arith.constant 1 : i32
    %1 = arith.select %0, %c1_i32, %c2_i32 : i32
    %2 = arith.remsi %arg0, %1 : i32
    %c0_i32_0 = arith.constant 0 : i32
    %3 = arith.cmpi ne, %2, %c0_i32_0 : i32
    %c0_i32_1 = arith.constant 0 : i32
    %4 = arith.cmpi slt, %2, %c0_i32_1 : i32
    %c0_i32_2 = arith.constant 0 : i32
    %5 = arith.cmpi slt, %1, %c0_i32_2 : i32
    %6 = arith.xori %4, %5 : i1
    %7 = arith.andi %6, %3 : i1
    %8 = arith.addi %2, %1 : i32
    %9 = arith.select %7, %8, %2 : i32
    %c2_i32_3 = arith.constant 2 : i32
    %10 = arith.cmpi sge, %arg0, %c2_i32_3 : i32
    %11 = arith.extui %10 : i1 to i32
    %c0_i32_4 = arith.constant 0 : i32
    %12 = arith.cmpi ne, %11, %c0_i32_4 : i32
    scf.if %12 {
      %c0_i32_12 = arith.constant 0 : i32
      %c0_i32_13 = arith.constant 0 : i32
      %c0_i32_14 = arith.constant 0 : i32
      %c0_i32_15 = arith.constant 0 : i32
      %22 = tpu.memref_slice %arg1[%c0_i32_13, %c0_i32_14, %c0_i32_15] : memref<4x16x256xf32, #tpu.memory_space<any>> -> memref<4x8x256xf32, #tpu.memory_space<any>>
      %c0_i32_16 = arith.constant 0 : i32
      %c0_i32_17 = arith.constant 0 : i32
      %c0_i32_18 = arith.constant 0 : i32
      %23 = tpu.memref_slice %arg2[%c0_i32_12, %c0_i32_16, %c0_i32_17, %c0_i32_18] : memref<2x4x8x256xf32, #tpu.memory_space<any>> -> memref<1x4x8x256xf32, #tpu.memory_space<any>>
      %24 = tpu.memref_squeeze %23 : memref<1x4x8x256xf32, #tpu.memory_space<any>> -> memref<4x8x256xf32, #tpu.memory_space<any>>
      %25 = tpu.memref_slice %arg3[%9] : memref<2x!tpu.dma_semaphore, #tpu.memory_space<semaphore_mem>> -> memref<1x!tpu.dma_semaphore, #tpu.memory_space<semaphore_mem>>
      %26 = tpu.memref_squeeze %25 : memref<1x!tpu.dma_semaphore, #tpu.memory_space<semaphore_mem>> -> memref<!tpu.dma_semaphore, #tpu.memory_space<semaphore_mem>>
      tpu.wait_dma2 semaphore(%26 : memref<!tpu.dma_semaphore, #tpu.memory_space<semaphore_mem>>) src(%22 : memref<4x8x256xf32, #tpu.memory_space<any>>) dst(%24 : memref<4x8x256xf32, #tpu.memory_space<any>>)
    } else {
    }
    %c8_i32 = arith.constant 8 : i32
    %13 = arith.muli %arg0, %c8_i32 : i32
    %c0_i32_5 = arith.constant 0 : i32
    %c0_i32_6 = arith.constant 0 : i32
    %14 = tpu.memref_slice %arg1[%c0_i32_5, %13, %c0_i32_6] : memref<4x16x256xf32, #tpu.memory_space<any>> -> memref<4x8x256xf32, #tpu.memory_space<any>>
    %c0_i32_7 = arith.constant 0 : i32
    %c0_i32_8 = arith.constant 0 : i32
    %c0_i32_9 = arith.constant 0 : i32
    %15 = tpu.memref_slice %arg2[%arg0, %c0_i32_7, %c0_i32_8, %c0_i32_9] : memref<2x4x8x256xf32, #tpu.memory_space<any>> -> memref<1x4x8x256xf32, #tpu.memory_space<any>>
    %16 = tpu.memref_squeeze %15 : memref<1x4x8x256xf32, #tpu.memory_space<any>> -> memref<4x8x256xf32, #tpu.memory_space<any>>
    %17 = tpu.memref_slice %arg3[%9] : memref<2x!tpu.dma_semaphore, #tpu.memory_space<semaphore_mem>> -> memref<1x!tpu.dma_semaphore, #tpu.memory_space<semaphore_mem>>
    %18 = tpu.memref_squeeze %17 : memref<1x!tpu.dma_semaphore, #tpu.memory_space<semaphore_mem>> -> memref<!tpu.dma_semaphore, #tpu.memory_space<semaphore_mem>>
    tpu.enqueue_dma source(%14 : memref<4x8x256xf32, #tpu.memory_space<any>>) target(%16 : memref<4x8x256xf32, #tpu.memory_space<any>>) target_semaphore(%18 : memref<!tpu.dma_semaphore, #tpu.memory_space<semaphore_mem>>)
    %c1_i32_10 = arith.constant 1 : i32
    %19 = arith.cmpi eq, %arg0, %c1_i32_10 : i32
    %20 = arith.extui %19 : i1 to i32
    %c0_i32_11 = arith.constant 0 : i32
    %21 = arith.cmpi ne, %20, %c0_i32_11 : i32
    scf.if %21 {
      %c0_i32_12 = arith.constant 0 : i32
      %22 = arith.subi %arg0, %c0_i32_12 : i32
      %c2_i32_13 = arith.constant 2 : i32
      %c0_i32_14 = arith.constant 0 : i32
      %23 = arith.cmpi eq, %c2_i32_13, %c0_i32_14 : i32
      %c1_i32_15 = arith.constant 1 : i32
      %24 = arith.select %23, %c1_i32_15, %c2_i32_13 : i32
      %25 = arith.remsi %22, %24 : i32
      %c0_i32_16 = arith.constant 0 : i32
      %26 = arith.cmpi ne, %25, %c0_i32_16 : i32
      %c0_i32_17 = arith.constant 0 : i32
      %27 = arith.cmpi slt, %25, %c0_i32_17 : i32
      %c0_i32_18 = arith.constant 0 : i32
      %28 = arith.cmpi slt, %24, %c0_i32_18 : i32
      %29 = arith.xori %27, %28 : i1
      %30 = arith.andi %29, %26 : i1
      %31 = arith.addi %25, %24 : i32
      %32 = arith.select %30, %31, %25 : i32
      %c0_i32_19 = arith.constant 0 : i32
      %c0_i32_20 = arith.constant 0 : i32
      %c0_i32_21 = arith.constant 0 : i32
      %c0_i32_22 = arith.constant 0 : i32
      %33 = tpu.memref_slice %arg1[%c0_i32_20, %c0_i32_21, %c0_i32_22] : memref<4x16x256xf32, #tpu.memory_space<any>> -> memref<4x8x256xf32, #tpu.memory_space<any>>
      %c0_i32_23 = arith.constant 0 : i32
      %c0_i32_24 = arith.constant 0 : i32
      %c0_i32_25 = arith.constant 0 : i32
      %34 = tpu.memref_slice %arg2[%c0_i32_19, %c0_i32_23, %c0_i32_24, %c0_i32_25] : memref<2x4x8x256xf32, #tpu.memory_space<any>> -> memref<1x4x8x256xf32, #tpu.memory_space<any>>
      %35 = tpu.memref_squeeze %34 : memref<1x4x8x256xf32, #tpu.memory_space<any>> -> memref<4x8x256xf32, #tpu.memory_space<any>>
      %36 = tpu.memref_slice %arg3[%32] : memref<2x!tpu.dma_semaphore, #tpu.memory_space<semaphore_mem>> -> memref<1x!tpu.dma_semaphore, #tpu.memory_space<semaphore_mem>>
      %37 = tpu.memref_squeeze %36 : memref<1x!tpu.dma_semaphore, #tpu.memory_space<semaphore_mem>> -> memref<!tpu.dma_semaphore, #tpu.memory_space<semaphore_mem>>
      tpu.wait_dma2 semaphore(%37 : memref<!tpu.dma_semaphore, #tpu.memory_space<semaphore_mem>>) src(%33 : memref<4x8x256xf32, #tpu.memory_space<any>>) dst(%35 : memref<4x8x256xf32, #tpu.memory_space<any>>)
      %c1_i32_26 = arith.constant 1 : i32
      %38 = arith.subi %arg0, %c1_i32_26 : i32
      %c2_i32_27 = arith.constant 2 : i32
      %c0_i32_28 = arith.constant 0 : i32
      %39 = arith.cmpi eq, %c2_i32_27, %c0_i32_28 : i32
      %c1_i32_29 = arith.constant 1 : i32
      %40 = arith.select %39, %c1_i32_29, %c2_i32_27 : i32
      %41 = arith.remsi %38, %40 : i32
      %c0_i32_30 = arith.constant 0 : i32
      %42 = arith.cmpi ne, %41, %c0_i32_30 : i32
      %c0_i32_31 = arith.constant 0 : i32
      %43 = arith.cmpi slt, %41, %c0_i32_31 : i32
      %c0_i32_32 = arith.constant 0 : i32
      %44 = arith.cmpi slt, %40, %c0_i32_32 : i32
      %45 = arith.xori %43, %44 : i1
      %46 = arith.andi %45, %42 : i1
      %47 = arith.addi %41, %40 : i32
      %48 = arith.select %46, %47, %41 : i32
      %c0_i32_33 = arith.constant 0 : i32
      %c0_i32_34 = arith.constant 0 : i32
      %c0_i32_35 = arith.constant 0 : i32
      %c0_i32_36 = arith.constant 0 : i32
      %49 = tpu.memref_slice %arg1[%c0_i32_34, %c0_i32_35, %c0_i32_36] : memref<4x16x256xf32, #tpu.memory_space<any>> -> memref<4x8x256xf32, #tpu.memory_space<any>>
      %c0_i32_37 = arith.constant 0 : i32
      %c0_i32_38 = arith.constant 0 : i32
      %c0_i32_39 = arith.constant 0 : i32
      %50 = tpu.memref_slice %arg2[%c0_i32_33, %c0_i32_37, %c0_i32_38, %c0_i32_39] : memref<2x4x8x256xf32, #tpu.memory_space<any>> -> memref<1x4x8x256xf32, #tpu.memory_space<any>>
      %51 = tpu.memref_squeeze %50 : memref<1x4x8x256xf32, #tpu.memory_space<any>> -> memref<4x8x256xf32, #tpu.memory_space<any>>
      %52 = tpu.memref_slice %arg3[%48] : memref<2x!tpu.dma_semaphore, #tpu.memory_space<semaphore_mem>> -> memref<1x!tpu.dma_semaphore, #tpu.memory_space<semaphore_mem>>
      %53 = tpu.memref_squeeze %52 : memref<1x!tpu.dma_semaphore, #tpu.memory_space<semaphore_mem>> -> memref<!tpu.dma_semaphore, #tpu.memory_space<semaphore_mem>>
      tpu.wait_dma2 semaphore(%53 : memref<!tpu.dma_semaphore, #tpu.memory_space<semaphore_mem>>) src(%49 : memref<4x8x256xf32, #tpu.memory_space<any>>) dst(%51 : memref<4x8x256xf32, #tpu.memory_space<any>>)
    } else {
    }
    return
  }
}

</mosaic_0001>

<llo_original>
// kernel: tpu_custom_call.1
$region0: #{tpu_custom_call.1}
  #allocation0 [shape = 'u32[]', space=smem, size = 0x4, offset = 0x4, fixed_abs, tag = 'smem constant byte address 0x4 - core index']
  #allocation1 [shape = 'u32[144,128]{1,0:T(1,128)}', space=vmem, size = 0x12000, scoped, tag = 'internal scratch']
  #allocation2 [shape = 's32[2]{0}', space=sflag, size = 0x8, scoped, tag = 'scratch operand']
  #allocation3 [shape = 's32[]', space=sflag, size = 0x4, offset = 0, fixed_abs, tag = 'sflag constant byte address 0x0 - dummy sync flag']
  %s0 = inlined_call_operand.hbm [shape: f32[4,16,256], index: 0, kind: input, shape index: {}]
  %s1 = inlined_call_operand.hbm [shape: f32[2,4,8,256], index: 1, kind: output, shape index: {}]
  %s2 = sld [smem:[#allocation0]]
  $region17: #{tpu_custom_call.1} parent=0
    _
  %s4 = ssub.s32 1, %s2
  %s5 = scalar_select 0, %s4, %s2
  loop: start=0, step=1, limit=2
  $region2: #{tpu_custom_call.1} parent=0 // loop_pre_header
    _
  $region3: #{tpu_custom_call.1} parent=0 // loop_header
    %s7 = sphi 0, %s11
    %p8 = scmp.ge.s32.totalorder %s7, 2
  $region4: #{tpu_custom_call.1} parent=0 // loop_header_branch
    %10 = sbr.rel (%p8) target = $region8
  $region5: #{tpu_custom_call.1} parent=0 // loop_body
    #allocation4 [shape = 'u32[3]{0}', space=smem, size = 0xc, scoped, tag = 'DMA stride descriptor']
    %s12 = sadd.s32 %s7, 1
    %p13 = scmp.lt.s32.totalorder %s7, 0
    %s14 = ssub.s32 0, %s7
    %s15 = scalar_select %p13, %s14, %s7
    %s16 = sand.u32 %s15, 1
    %s17 = ssub.s32 0, %s16
    %s18 = scalar_select %p13, %s17, %s16
    %p19 = scmp.ne.s32.totalorder %s18, 0
    %p20 = scmp.lt.s32.totalorder %s18, 0
    %p21 = pnand %p20, %p19
    %p22 = pneg %p21
    %s23 = sadd.s32 %s18, 2
    %s24 = scalar_select %p22, %s23, %s18
    %p25 = scmp.ge.s32.totalorder %s7, 2
    // Predicated region
    $region9: #{tpu_custom_call.1} parent=5 // pred_check
      %p26 = pneg %p25
    $region10: #{tpu_custom_call.1} parent=5 // pred_check_branch
      %28 = sbr.rel (%p26) target = $region12
    $region11: #{tpu_custom_call.1} parent=5 // pred_region
      %s29 = scalar_lea.sflag [#allocation2], %s24
      %s30 = smul.u32 8, 4
      %s31 = smul.u32 %s30, 1
      %s32 = smul.u32 %s31, 2
      %s33 = sshll.u32 %s32, 4
      %34 = dma.done %s29, %s33
    $region12: #{tpu_custom_call.1} parent=5 // pred_fallthru
      _
    %s35 = smul.u32 %s7, 8
    %s36 = sshra.s32 %s35, 3
    %s37 = sand.u32 %s35, 7
    %s38 = smul.u32 %s36, 2
    %s39 = smul.addr %s38, 128
    %s40 = scalar_lea.hbm %s0, %s39
    %s41 = smul.addr %s35, 128
    %s42 = scalar_lea.hbm %s1, %s41
    %s43 = scalar_lea.sflag [#allocation2], %s24
    %s45 = sshll.u32 1, 14
    %s46 = sxor.u32 4294967295, %s45
    %s49 = sshll.u32 3, 24
    %s50 = sxor.u32 4294967295, %s49
    %s51 = sand.u32 0, %s50
    %s53 = sor.u32 %s51, 0
    %56 = sst [smem:[#allocation4]] 512
    %s57 = scalar_lea.smem [#allocation4], 1
    %58 = sst [smem:[%s57]] 256
    %s59 = scalar_lea.smem [#allocation4], 2
    %60 = sst [smem:[%s59]] 16
    %62 = dma.general %s40, 1024, %s42, %s43, [#allocation3], [#allocation4], %s53, 0
    %p63 = scmp.eq.s32.totalorder %s7, 1
    // Predicated region
    $region13: #{tpu_custom_call.1} parent=5 // pred_check
      %p64 = pneg %p63
    $region14: #{tpu_custom_call.1} parent=5 // pred_check_branch
      %66 = sbr.rel (%p64) target = $region16
    $region15: #{tpu_custom_call.1} parent=5 // pred_region
      %s67 = smul.u32 8, 4
      %s68 = smul.u32 %s67, 1
      %s69 = smul.u32 %s68, 2
      %s70 = sshll.u32 %s69, 4
      %71 = dma.done %s43, %s70
      %s72 = ssub.s32 %s7, 1
      %p73 = scmp.lt.s32.totalorder %s72, 0
      %s74 = ssub.s32 0, %s72
      %s75 = scalar_select %p73, %s74, %s72
      %s76 = sand.u32 %s75, 1
      %s77 = ssub.s32 0, %s76
      %s78 = scalar_select %p73, %s77, %s76
      %p79 = scmp.ne.s32.totalorder %s78, 0
      %p80 = scmp.lt.s32.totalorder %s78, 0
      %p81 = pnand %p80, %p79
      %p82 = pneg %p81
      %s83 = sadd.s32 %s78, 2
      %s84 = scalar_select %p82, %s83, %s78
      %s85 = scalar_lea.sflag [#allocation2], %s84
      %s86 = sshll.u32 %s69, 4
      %87 = dma.done %s85, %s86
    $region16: #{tpu_custom_call.1} parent=5 // pred_fallthru
      _
  $region6: #{tpu_custom_call.1} parent=0 // loop_footer
    %s11 = sadd.s32 1, %s7
  $region7: #{tpu_custom_call.1} parent=0 // loop_footer_branch
    %6 = sbr.rel target = $region3
  $region8: #{tpu_custom_call.1} parent=0 // loop_exit
    _
  %88 = vsyncmov [#allocation2]
  %s89 = vpop.sfrf %88
  %p90 = scmp.eq.s32.totalorder %s89, 0
  %p91 = pneg %p90
  %93 = shalt.err (%p91)
  %s94 = scalar_lea.sflag [#allocation2], 1
  %95 = vsyncmov %s94
  %s96 = vpop.sfrf %95
  %p97 = scmp.eq.s32.totalorder %s96, 0
  %p98 = pneg %p97
  %100 = shalt.err (%p98)

</llo_original>
